<compile_context>
chip_gen: v7x
topology: tpu7x:2x2x1
jax: 0.10.0
libtpu: 0.0.40
codegen_flags: <defaults>
</compile_context>

<pallas_src>
import functools

import jax
import jax.numpy as jnp
from jax.experimental import pallas as pl
from jax.experimental.pallas import tpu as pltpu


# ----------------------------------------------------------------------------
# Pallas kernel: out = x + pos  (pos broadcast over the batch-row axis)
# ----------------------------------------------------------------------------
def pos_enc_kernel(x_ref, p_ref, o_ref):
    # x_ref: (Bb, T*H)   p_ref: (1, T*H)   o_ref: (Bb, T*H)
    o_ref[...] = x_ref[...] + p_ref[...]


# ----------------------------------------------------------------------------
# Positional-encoding table (equivalent of the module's __init__, plain JAX glue)
# ----------------------------------------------------------------------------
def make_positional_encoding_table(num_hiddens, max_len=1000, dtype=jnp.float32):
    position = jnp.arange(max_len, dtype=jnp.float32).reshape(-1, 1)
    div = jnp.power(
        10000.0, jnp.arange(0, num_hiddens, 2, dtype=jnp.float32) / num_hiddens)
    angles = position / div                                  # (max_len, ceil(H/2))
    P = jnp.zeros((1, max_len, num_hiddens), dtype=jnp.float32)
    P = P.at[:, :, 0::2].set(jnp.sin(angles))
    P = P.at[:, :, 1::2].set(jnp.cos(angles[:, : num_hiddens // 2]))  # odd-H safe
    return P.astype(dtype)


# ----------------------------------------------------------------------------
# Wrapper: layout plumbing + pallas_call
# ----------------------------------------------------------------------------
@functools.partial(jax.jit, static_argnames=())
def positional_encoding_forward(X, P):
    B, T, H = X.shape
    # Flatten the (T, H) tail so the kernel sees one lane-dense row per batch element.
    x2 = X.reshape(B, T * H)
    p2 = P[:, :T, :].reshape(1, T * H).astype(X.dtype)

    # Row-tile choice: full batch per step when small; otherwise 8-row multiples
    # that keep the input+output tiles comfortably inside VMEM.
    itemsize = jnp.dtype(X.dtype).itemsize
    if B <= 8:
        Bb = B
    else:
        Bb = 8
        while (B % (Bb * 2) == 0) and ((Bb * 2) * T * H * itemsize <= 4 * 1024 * 1024):
            Bb *= 2
        if B % Bb != 0:          # keep the (8,128) block rule trivially satisfied
            Bb = B
    grid_b = B // Bb

    out2 = pl.pallas_call(
        pos_enc_kernel,
        out_shape=jax.ShapeDtypeStruct((B, T * H), X.dtype),
        grid=(grid_b,),
        in_specs=[
            pl.BlockSpec((Bb, T * H), lambda i: (i, 0)),   # activations, tiled over batch
            pl.BlockSpec((1, T * H), lambda i: (0, 0)),    # positional table, grid-invariant
        ],
        out_specs=pl.BlockSpec((Bb, T * H), lambda i: (i, 0)),
        compiler_params=pltpu.CompilerParams(
            dimension_semantics=("parallel",)),            # batch axis independent (v7x 2 TCs)
    )(x2, p2)

    # TODO(synk): nn.Dropout is identity in eval mode; training-mode stochastic dropout
    # (pltpu.prng_*) is not implemented here.
    return out2.reshape(B, T, H)


if __name__ == "__main__":
    B, T, H = 2, 8, 32
    max_len = 1000

    key = jax.random.PRNGKey(0)
    X = jax.random.normal(key, (B, T, H), dtype=jnp.float32)
    P = make_positional_encoding_table(H, max_len=max_len)

    out = positional_encoding_forward(X, P)
    jax.block_until_ready(out)

    ref = X + P[:, :T, :]
    assert out.shape == (B, T, H)
    assert bool(jnp.allclose(out, ref, atol=1e-6, rtol=1e-6))
    print("KERNEL_OK")
</pallas_src>

<mosaic_0001>
module attributes {stable_mosaic.version = 11 : i64} {
  func.func @pos_enc_kernel(%arg0: i32, %arg1: memref<2x256xf32, #tpu.memory_space<vmem>>, %arg2: memref<1x256xf32, #tpu.memory_space<vmem>>, %arg3: memref<2x256xf32, #tpu.memory_space<vmem>>) attributes {dimension_semantics = [#tpu.dimension_semantics<parallel>], iteration_bounds = array<i64: 1>, scalar_prefetch = 0 : i64, scratch_operands = 0 : i64, tpu.core_type = #tpu.core_type<tc>, window_params = [{transform_indices = @transform_0, window_bounds = array<i64: 2, 256>}, {pipeline_mode = #tpu.pipeline_mode<synchronous>, transform_indices = @transform_1, window_bounds = array<i64: 1, 256>}, {transform_indices = @transform_2, window_bounds = array<i64: 2, 256>}]} {
    %c0 = arith.constant 0 : index
    %c0_0 = arith.constant 0 : index
    %0 = vector.load %arg1[%c0, %c0_0] : memref<2x256xf32, #tpu.memory_space<vmem>>, vector<2x256xf32>
    %c0_1 = arith.constant 0 : index
    %c0_2 = arith.constant 0 : index
    %1 = vector.load %arg2[%c0_1, %c0_2] : memref<1x256xf32, #tpu.memory_space<vmem>>, vector<1x256xf32>
    %2 = vector.broadcast %1 : vector<1x256xf32> to vector<2x256xf32>
    %3 = arith.addf %0, %2 : vector<2x256xf32>
    %c0_3 = arith.constant 0 : index
    %c0_4 = arith.constant 0 : index
    %4 = vector.load %arg3[%c0_3, %c0_4] : memref<2x256xf32, #tpu.memory_space<vmem>>, vector<2x256xf32>
    tpu.vector_store %arg3[%c0_3, %c0_4], %3 {strides = array<i32>} : memref<2x256xf32, #tpu.memory_space<vmem>>, vector<2x256xf32>,
    return
  }
  func.func @transform_0(%arg0: i32) -> (i32, i32) {
    %c0_i32 = arith.constant 0 : i32
    %c0_i32_0 = arith.constant 0 : i32
    return %arg0, %c0_i32 : i32, i32
  }
  func.func @transform_1(%arg0: i32) -> (i32, i32) {
    %c0_i32 = arith.constant 0 : i32
    %c0_i32_0 = arith.constant 0 : i32
    %c0_i32_1 = arith.constant 0 : i32
    return %c0_i32, %c0_i32_0 : i32, i32
  }
  func.func @transform_2(%arg0: i32) -> (i32, i32) {
    %c0_i32 = arith.constant 0 : i32
    %c0_i32_0 = arith.constant 0 : i32
    return %arg0, %c0_i32 : i32, i32
  }
}

</mosaic_0001>

<llo_original>
// kernel: positional_encoding_forward.1
$region0: #{positional_encoding_forward.1}
  #allocation0 [shape = 'u32[]', space=smem, size = 0x4, offset = 0x4, fixed_abs, tag = 'smem constant byte address 0x4 - core index']
  #allocation1 [shape = 'u32[144,128]{1,0:T(1,128)}', space=vmem, size = 0x12000, scoped, tag = 'internal scratch']
  %s0 = inlined_call_operand.vmem [shape: f32[2,256], index: 0, kind: input, shape index: {}]
  %s1 = inlined_call_operand.vmem [shape: f32[1,256], index: 1, kind: input, shape index: {}]
  %s2 = inlined_call_operand.vmem [shape: f32[2,256], index: 2, kind: output, shape index: {}]
  %s3 = sld [smem:[#allocation0]]
  $region18: #{positional_encoding_forward.1} parent=0
    _
  %s5 = ssub.s32 1, %s3
  %s6 = scalar_select 0, %s5, %s3
  // Predicated region
  $region2: #{positional_encoding_forward.1} parent=0 // pred_check
    _
  $region3: #{positional_encoding_forward.1} parent=0 // pred_check_branch
    %8 = sbr.rel (0) target = $region5
  $region4: #{positional_encoding_forward.1} parent=0 // pred_region
    _
  $region5: #{positional_encoding_forward.1} parent=0 // pred_fallthru
    _
  // Predicated region
  $region6: #{positional_encoding_forward.1} parent=0 // pred_check
    _
  $region7: #{positional_encoding_forward.1} parent=0 // pred_check_branch
    %10 = sbr.rel (0) target = $region9
  $region8: #{positional_encoding_forward.1} parent=0 // pred_region
    _
  $region9: #{positional_encoding_forward.1} parent=0 // pred_fallthru
    _
  %v11 = vld [vmem:[%s0] sm:$0xf]
  %v12 = vld [vmem:[%s1] sm:$0x3]
  %v14 = vlaneseq
  %v15 = vshrl.u32 %v14, 7
  %v16 = vsub.s32 0, %v15
  %v17 = vrot.slane %v12, %v16
  %v18 = vlaneseq
  %v19 = vshrl.u32 %v18, 7
  %v20 = vsub.s32 1, %v19
  %v21 = vrot.slane %v12, %v20
  %v22 = vcombine.low %v17, %v21
  %v24 = vunpack.c.l.s4 1983009808
  %v25 = vunpack.c.0.s8 %v24
  %v26 = vlaneseq
  %v27 = vshrl.u32 %v26, 7
  %v28 = vsub.s32 %v25, %v27
  %v29 = vrot.slane %v22, %v28
  %v31 = vadd.f32 %v11, %v29
  %32 = vst [vmem:[%s2] sm:$0xf] %v31
  // Predicated region
  $region10: #{positional_encoding_forward.1} parent=0 // pred_check
    _
  $region11: #{positional_encoding_forward.1} parent=0 // pred_check_branch
    %34 = sbr.rel (0) target = $region13
  $region12: #{positional_encoding_forward.1} parent=0 // pred_region
    _
  $region13: #{positional_encoding_forward.1} parent=0 // pred_fallthru
    _
  // Predicated region
  $region14: #{positional_encoding_forward.1} parent=0 // pred_check
    _
  $region15: #{positional_encoding_forward.1} parent=0 // pred_check_branch
    %36 = sbr.rel (0) target = $region17
  $region16: #{positional_encoding_forward.1} parent=0 // pred_region
    _
  $region17: #{positional_encoding_forward.1} parent=0 // pred_fallthru
    _

</llo_original>
